<compile_context>
chip_gen: v7x
topology: tpu7x:2x2x1
jax: 0.10.0
libtpu: 0.0.40
codegen_flags: <defaults>
</compile_context>

<pallas_src>
import jax
import jax.numpy as jnp
from jax.experimental import pallas as pl
from jax.experimental.pallas import tpu as pltpu

B_J0 = 0.01
BETA = 1.8      # is_adaptive = 1
DT = 1.0
R_M = 1.0


# ---------------------------------------------------------------------------
# Kernel A: hoisted dense layer for all timesteps (one MXU GEMM).
# ---------------------------------------------------------------------------
def dense_all_steps_kernel(x_ref, w_ref, bias_ref, out_ref):
    # bf16 operands, f32 accumulate on the MXU; bias added in f32.
    out_ref[...] = (
        jnp.dot(x_ref[...], w_ref[...], preferred_element_type=jnp.float32)
        + bias_ref[...]
    )


def dense_all_steps(x_flat_bf16, w_bf16, bias_f32, *, tm=256):
    """d_input for all timesteps: (seq*batch, in) @ (in, out) + bias -> f32."""
    M, K = x_flat_bf16.shape
    N = w_bf16.shape[1]
    # Tile only the row (seq*batch) dimension; weight and bias stay resident in
    # VMEM across all row tiles.  For production layer sizes also tile K/N with
    # a VMEM accumulator (pl.when init/finalize) and size tiles for the target
    # VMEM (v7x: 64 MiB physical / 32 MiB default scoped limit).
    if M % tm != 0:
        tm = M  # small / ragged M: a single row tile (fine for demo shapes)
    grid = (M // tm,)

    return pl.pallas_call(
        dense_all_steps_kernel,
        out_shape=jax.ShapeDtypeStruct((M, N), jnp.float32),
        grid_spec=pltpu.PrefetchScalarGridSpec(
            num_scalar_prefetch=0,
            grid=grid,
            in_specs=[
                pl.BlockSpec((tm, K), lambda i: (i, 0)),   # x rows
                pl.BlockSpec((K, N), lambda i: (0, 0)),    # weight (resident)
                pl.BlockSpec((1, N), lambda i: (0, 0)),    # bias (resident)
            ],
            out_specs=pl.BlockSpec((tm, N), lambda i: (i, 0)),
        ),
        compiler_params=pltpu.CompilerParams(
            # "parallel" row tiles -> work can shard across v7x's 2 TensorCores.
            dimension_semantics=("parallel",),
        ),
    )(x_flat_bf16, w_bf16, bias_f32)


# ---------------------------------------------------------------------------
# Kernel B: adaptive-LIF recurrence over the whole sequence (VPU only).
# Grid axis = timestep ("arbitrary"); mem/spike/b held in VMEM scratch.
# Outputs: per-timestep spike train + final mem/b state.
# ---------------------------------------------------------------------------
def lif_scan_kernel(d_ref, alpha_ref, ro_ref, mem0_ref, spike0_ref, b0_ref,
                    spike_seq_ref, mem_out_ref, b_out_ref,
                    mem_sc, spike_sc, b_sc):
    t = pl.program_id(0)

    @pl.when(t == 0)
    def _():
        mem_sc[...] = mem0_ref[...]
        spike_sc[...] = spike0_ref[...]
        b_sc[...] = b0_ref[...]

    alpha = alpha_ref[...]            # (1, out) -> broadcast over batch
    ro = ro_ref[...]
    d_input = d_ref[0]                # (batch, out) slice for timestep t

    spike_prev = spike_sc[...]
    b_new = ro * b_sc[...] + (1.0 - ro) * spike_prev
    b_th = B_J0 + BETA * b_new
    mem_new = (mem_sc[...] * alpha
               + (1.0 - alpha) * R_M * d_input
               - b_th * spike_prev * DT)
    spike_new = (mem_new - b_th > 0.0).astype(jnp.float32)

    mem_sc[...] = mem_new
    spike_sc[...] = spike_new
    b_sc[...] = b_new

    # Per-timestep spike output (this is what a downstream layer consumes).
    spike_seq_ref[0] = spike_new

    # Final mem / b state written back to HBM only once, at the last timestep.
    @pl.when(t == pl.num_programs(0) - 1)
    def _():
        mem_out_ref[...] = mem_new
        b_out_ref[...] = b_new


def lif_scan(d_seq, alpha, ro, mem0, spike0, b0):
    seq, batch, n = d_seq.shape
    state_sd = jax.ShapeDtypeStruct((batch, n), jnp.float32)
    state_spec = pl.BlockSpec((batch, n), lambda t: (0, 0))

    return pl.pallas_call(
        lif_scan_kernel,
        out_shape=(jax.ShapeDtypeStruct((seq, batch, n), jnp.float32),
                   state_sd, state_sd),
        grid_spec=pltpu.PrefetchScalarGridSpec(
            num_scalar_prefetch=0,
            grid=(seq,),
            in_specs=[
                pl.BlockSpec((1, batch, n), lambda t: (t, 0, 0)),  # d_input[t]
                pl.BlockSpec((1, n), lambda t: (0, 0)),            # alpha
                pl.BlockSpec((1, n), lambda t: (0, 0)),            # ro
                state_spec,                                        # mem0
                state_spec,                                        # spike0
                state_spec,                                        # b0
            ],
            out_specs=[
                pl.BlockSpec((1, batch, n), lambda t: (t, 0, 0)),  # spikes[t]
                state_spec,                                        # final mem
                state_spec,                                        # final b
            ],
            scratch_shapes=[pltpu.VMEM((batch, n), jnp.float32)] * 3,
        ),
        compiler_params=pltpu.CompilerParams(
            # Sequential recurrence + resident state blocks -> "arbitrary".
            dimension_semantics=("arbitrary",),
        ),
    )(d_seq, alpha, ro, mem0, spike0, b0)


# ---------------------------------------------------------------------------
# Full forward over a spike sequence (equivalent to calling the PyTorch
# module's forward() once per timestep after set_neuron_state()).
# ---------------------------------------------------------------------------
def spike_dense_sequence(x_seq, w, bias, tau_m, tau_adp, mem0, spike0, b0):
    """x_seq: (seq, batch, input_dim).

    Returns (spike_seq, mem_final, b_final); spike_seq[-1] is the final spike.
    """
    seq, batch, input_dim = x_seq.shape
    output_dim = w.shape[1]

    # Decay factors are constants across timesteps -> compute once.
    alpha = jnp.exp(-DT / tau_m)
    ro = jnp.exp(-DT / tau_adp)

    # Hoisted GEMM over all timesteps (bf16 spikes/weights, f32 accumulation).
    x_flat = x_seq.reshape(seq * batch, input_dim).astype(jnp.bfloat16)
    w_bf16 = w.astype(jnp.bfloat16)
    d_flat = dense_all_steps(x_flat, w_bf16, bias)
    d_seq = d_flat.reshape(seq, batch, output_dim)

    # Elementwise recurrence; the seq loop lives inside one gridded kernel.
    spike_seq, mem, b = lif_scan(d_seq, alpha, ro, mem0, spike0, b0)
    return spike_seq, mem, b


# TODO(synk): quantize()/dquantize() fake-quant paths (params/dparams != None)
# are not implemented; this kernel covers the params=None forward path.


# ---------------------------------------------------------------------------
# Pure-JAX reference for the recurrence (fed with the kernel's d_input so the
# comparison isolates the LIF scan kernel).
# ---------------------------------------------------------------------------
def lif_reference(d_seq, alpha, ro, mem0, spike0, b0):
    def step(carry, d_t):
        mem, spike, b = carry
        b_new = ro * b + (1.0 - ro) * spike
        b_th = B_J0 + BETA * b_new
        mem_new = mem * alpha + (1.0 - alpha) * R_M * d_t - b_th * spike * DT
        spike_new = (mem_new - b_th > 0.0).astype(jnp.float32)
        return (mem_new, spike_new, b_new), spike_new

    (mem, spike, b), spike_seq = jax.lax.scan(step, (mem0, spike0, b0), d_seq)
    return spike_seq, mem, b


if __name__ == "__main__":
    # Small but lane-aligned shapes (last dim = 128 -> unmasked vector stores).
    batch, input_dim, output_dim, seq = 8, 128, 128, 8

    key = jax.random.PRNGKey(0)
    k_w, k_b, k_tm, k_ta, k_x = jax.random.split(key, 5)

    # nn.Linear default init: U(-1/sqrt(in), 1/sqrt(in)); stored transposed.
    bound = 1.0 / (input_dim ** 0.5)
    w = jax.random.uniform(k_w, (input_dim, output_dim), jnp.float32, -bound, bound)
    bias = jax.random.uniform(k_b, (1, output_dim), jnp.float32, -bound, bound)

    # tau_m ~ N(20, 5), tau_adp ~ N(150, 5)  (tau_initializer='normal')
    tau_m = 20.0 + 5.0 * jax.random.normal(k_tm, (1, output_dim), jnp.float32)
    tau_adp = 150.0 + 5.0 * jax.random.normal(k_ta, (1, output_dim), jnp.float32)

    # set_neuron_state: zero-initialized states.
    mem0 = jnp.zeros((batch, output_dim), jnp.float32)
    spike0 = jnp.zeros((batch, output_dim), jnp.float32)
    b0 = jnp.zeros((batch, output_dim), jnp.float32)

    # Binary input spikes over a short sequence.
    x_seq = (jax.random.uniform(k_x, (seq, batch, input_dim)) > 0.5).astype(jnp.float32)

    fwd = jax.jit(spike_dense_sequence)
    spike_seq, mem, b = fwd(x_seq, w, bias, tau_m, tau_adp, mem0, spike0, b0)
    jax.block_until_ready((spike_seq, mem, b))
    spike = spike_seq[-1]

    assert spike_seq.shape == (seq, batch, output_dim)
    assert spike.shape == (batch, output_dim)
    assert mem.shape == (batch, output_dim)
    assert b.shape == (batch, output_dim)

    # --- correctness checks -------------------------------------------------
    # 1) GEMM kernel vs XLA bf16 matmul (no thresholding involved).
    x_flat = x_seq.reshape(seq * batch, input_dim).astype(jnp.bfloat16)
    w_bf16 = w.astype(jnp.bfloat16)
    d_kernel = jax.jit(dense_all_steps)(x_flat, w_bf16, bias)
    d_xla = jnp.dot(x_flat, w_bf16, preferred_element_type=jnp.float32) + bias
    assert float(jnp.max(jnp.abs(d_kernel - d_xla))) < 1e-3

    # 2) LIF scan kernel vs lax.scan reference driven by the same d_input.
    alpha = jnp.exp(-DT / tau_m)
    ro = jnp.exp(-DT / tau_adp)
    spike_seq_ref, mem_ref, b_ref = lif_reference(
        d_kernel.reshape(seq, batch, output_dim), alpha, ro, mem0, spike0, b0)
    assert float(jnp.max(jnp.abs(mem - mem_ref))) < 1e-3
    assert float(jnp.max(jnp.abs(b - b_ref))) < 1e-3
    assert float(jnp.mean(jnp.abs(spike_seq - spike_seq_ref))) < 1e-2
    assert bool(jnp.all((spike_seq == 0.0) | (spike_seq == 1.0)))

    print("KERNEL_OK")
</pallas_src>

<mosaic_0001>
module attributes {stable_mosaic.version = 11 : i64} {
  func.func @dense_all_steps_kernel(%arg0: i32, %arg1: memref<64x128xbf16, #tpu.memory_space<vmem>>, %arg2: memref<128x128xbf16, #tpu.memory_space<vmem>>, %arg3: memref<1x128xf32, #tpu.memory_space<vmem>>, %arg4: memref<64x128xf32, #tpu.memory_space<vmem>>) attributes {dimension_semantics = [#tpu.dimension_semantics<parallel>], iteration_bounds = array<i64: 1>, scalar_prefetch = 0 : i64, scratch_operands = 0 : i64, tpu.core_type = #tpu.core_type<tc>, window_params = [{transform_indices = @transform_0, window_bounds = array<i64: 64, 128>}, {pipeline_mode = #tpu.pipeline_mode<synchronous>, transform_indices = @transform_1, window_bounds = array<i64: 128, 128>}, {pipeline_mode = #tpu.pipeline_mode<synchronous>, transform_indices = @transform_2, window_bounds = array<i64: 1, 128>}, {transform_indices = @transform_3, window_bounds = array<i64: 64, 128>}]} {
    %c0 = arith.constant 0 : index
    %c0_0 = arith.constant 0 : index
    %0 = vector.load %arg1[%c0, %c0_0] : memref<64x128xbf16, #tpu.memory_space<vmem>>, vector<64x128xbf16>
    %c0_1 = arith.constant 0 : index
    %c0_2 = arith.constant 0 : index
    %1 = vector.load %arg2[%c0_1, %c0_2] : memref<128x128xbf16, #tpu.memory_space<vmem>>, vector<128x128xbf16>
    %cst = arith.constant dense<0.000000e+00> : vector<64x128xf32>
    %2 = tpu.matmul %0, %1, %cst {dimension_numbers = #tpu.dot_dimension_numbers<[1], [0], [0], [1], [0, 0, 1, 1], [], []>} : vector<64x128xbf16>, vector<128x128xbf16>, vector<64x128xf32> -> vector<64x128xf32>
    %c0_3 = arith.constant 0 : index
    %c0_4 = arith.constant 0 : index
    %3 = vector.load %arg3[%c0_3, %c0_4] : memref<1x128xf32, #tpu.memory_space<vmem>>, vector<1x128xf32>
    %4 = vector.broadcast %3 : vector<1x128xf32> to vector<64x128xf32>
    %5 = arith.addf %2, %4 : vector<64x128xf32>
    %c0_5 = arith.constant 0 : index
    %c0_6 = arith.constant 0 : index
    %6 = vector.load %arg4[%c0_5, %c0_6] : memref<64x128xf32, #tpu.memory_space<vmem>>, vector<64x128xf32>
    tpu.vector_store %arg4[%c0_5, %c0_6], %5 {strides = array<i32>} : memref<64x128xf32, #tpu.memory_space<vmem>>, vector<64x128xf32>,
    return
  }
  func.func @transform_0(%arg0: i32) -> (i32, i32) {
    %c0_i32 = arith.constant 0 : i32
    %c0_i32_0 = arith.constant 0 : i32
    return %arg0, %c0_i32 : i32, i32
  }
  func.func @transform_1(%arg0: i32) -> (i32, i32) {
    %c0_i32 = arith.constant 0 : i32
    %c0_i32_0 = arith.constant 0 : i32
    %c0_i32_1 = arith.constant 0 : i32
    return %c0_i32, %c0_i32_0 : i32, i32
  }
  func.func @transform_2(%arg0: i32) -> (i32, i32) {
    %c0_i32 = arith.constant 0 : i32
    %c0_i32_0 = arith.constant 0 : i32
    %c0_i32_1 = arith.constant 0 : i32
    return %c0_i32, %c0_i32_0 : i32, i32
  }
  func.func @transform_3(%arg0: i32) -> (i32, i32) {
    %c0_i32 = arith.constant 0 : i32
    %c0_i32_0 = arith.constant 0 : i32
    return %arg0, %c0_i32 : i32, i32
  }
}

module attributes {stable_mosaic.version = 11 : i64} {
  func.func @lif_scan_kernel(%arg0: i32, %arg1: memref<1x8x128xf32, #tpu.memory_space<vmem>>, %arg2: memref<1x128xf32, #tpu.memory_space<vmem>>, %arg3: memref<1x128xf32, #tpu.memory_space<vmem>>, %arg4: memref<8x128xf32, #tpu.memory_space<vmem>>, %arg5: memref<8x128xf32, #tpu.memory_space<vmem>>, %arg6: memref<8x128xf32, #tpu.memory_space<vmem>>, %arg7: memref<1x8x128xf32, #tpu.memory_space<vmem>>, %arg8: memref<8x128xf32, #tpu.memory_space<vmem>>, %arg9: memref<8x128xf32, #tpu.memory_space<vmem>>, %arg10: memref<8x128xf32, #tpu.memory_space<vmem>>, %arg11: memref<8x128xf32, #tpu.memory_space<vmem>>, %arg12: memref<8x128xf32, #tpu.memory_space<vmem>>) attributes {dimension_semantics = [#tpu.dimension_semantics<arbitrary>], iteration_bounds = array<i64: 8>, scalar_prefetch = 0 : i64, scratch_operands = 3 : i64, tpu.core_type = #tpu.core_type<tc>, window_params = [{transform_indices = @transform_0, window_bounds = array<i64: 1, 8, 128>}, {pipeline_mode = #tpu.pipeline_mode<synchronous>, transform_indices = @transform_1, window_bounds = array<i64: 1, 128>}, {pipeline_mode = #tpu.pipeline_mode<synchronous>, transform_indices = @transform_2, window_bounds = array<i64: 1, 128>}, {pipeline_mode = #tpu.pipeline_mode<synchronous>, transform_indices = @transform_3, window_bounds = array<i64: 8, 128>}, {pipeline_mode = #tpu.pipeline_mode<synchronous>, transform_indices = @transform_4, window_bounds = array<i64: 8, 128>}, {pipeline_mode = #tpu.pipeline_mode<synchronous>, transform_indices = @transform_5, window_bounds = array<i64: 8, 128>}, {transform_indices = @transform_6, window_bounds = array<i64: 1, 8, 128>}, {pipeline_mode = #tpu.pipeline_mode<synchronous>, transform_indices = @transform_7, window_bounds = array<i64: 8, 128>}, {pipeline_mode = #tpu.pipeline_mode<synchronous>, transform_indices = @transform_8, window_bounds = array<i64: 8, 128>}]} {
    %c0_i32 = arith.constant 0 : i32
    %0 = arith.cmpi eq, %arg0, %c0_i32 : i32
    %1 = arith.extui %0 : i1 to i32
    %c0_i32_0 = arith.constant 0 : i32
    %2 = arith.cmpi ne, %1, %c0_i32_0 : i32
    scf.if %2 {
      %c0_29 = arith.constant 0 : index
      %c0_30 = arith.constant 0 : index
      %48 = vector.load %arg4[%c0_29, %c0_30] : memref<8x128xf32, #tpu.memory_space<vmem>>, vector<8x128xf32>
      %c0_31 = arith.constant 0 : index
      %c0_32 = arith.constant 0 : index
      %49 = vector.load %arg10[%c0_31, %c0_32] : memref<8x128xf32, #tpu.memory_space<vmem>>, vector<8x128xf32>
      tpu.vector_store %arg10[%c0_31, %c0_32], %48 {strides = array<i32>} : memref<8x128xf32, #tpu.memory_space<vmem>>, vector<8x128xf32>,
      %c0_33 = arith.constant 0 : index
      %c0_34 = arith.constant 0 : index
      %50 = vector.load %arg5[%c0_33, %c0_34] : memref<8x128xf32, #tpu.memory_space<vmem>>, vector<8x128xf32>
      %c0_35 = arith.constant 0 : index
      %c0_36 = arith.constant 0 : index
      %51 = vector.load %arg11[%c0_35, %c0_36] : memref<8x128xf32, #tpu.memory_space<vmem>>, vector<8x128xf32>
      tpu.vector_store %arg11[%c0_35, %c0_36], %50 {strides = array<i32>} : memref<8x128xf32, #tpu.memory_space<vmem>>, vector<8x128xf32>,
      %c0_37 = arith.constant 0 : index
      %c0_38 = arith.constant 0 : index
      %52 = vector.load %arg6[%c0_37, %c0_38] : memref<8x128xf32, #tpu.memory_space<vmem>>, vector<8x128xf32>
      %c0_39 = arith.constant 0 : index
      %c0_40 = arith.constant 0 : index
      %53 = vector.load %arg12[%c0_39, %c0_40] : memref<8x128xf32, #tpu.memory_space<vmem>>, vector<8x128xf32>
      tpu.vector_store %arg12[%c0_39, %c0_40], %52 {strides = array<i32>} : memref<8x128xf32, #tpu.memory_space<vmem>>, vector<8x128xf32>,
    } else {
    }
    %c0 = arith.constant 0 : index
    %c0_1 = arith.constant 0 : index
    %3 = vector.load %arg2[%c0, %c0_1] : memref<1x128xf32, #tpu.memory_space<vmem>>, vector<1x128xf32>
    %c0_2 = arith.constant 0 : index
    %c0_3 = arith.constant 0 : index
    %4 = vector.load %arg3[%c0_2, %c0_3] : memref<1x128xf32, #tpu.memory_space<vmem>>, vector<1x128xf32>
    %c0_4 = arith.constant 0 : index
    %c0_5 = arith.constant 0 : index
    %c0_6 = arith.constant 0 : index
    %5 = vector.load %arg1[%c0_4, %c0_5, %c0_6] : memref<1x8x128xf32, #tpu.memory_space<vmem>>, vector<1x8x128xf32>
    %6 = vector.shape_cast %5 : vector<1x8x128xf32> to vector<8x128xf32>
    %c0_7 = arith.constant 0 : index
    %c0_8 = arith.constant 0 : index
    %7 = vector.load %arg11[%c0_7, %c0_8] : memref<8x128xf32, #tpu.memory_space<vmem>>, vector<8x128xf32>
    %c0_9 = arith.constant 0 : index
    %c0_10 = arith.constant 0 : index
    %8 = vector.load %arg12[%c0_9, %c0_10] : memref<8x128xf32, #tpu.memory_space<vmem>>, vector<8x128xf32>
    %9 = vector.broadcast %4 : vector<1x128xf32> to vector<8x128xf32>
    %10 = arith.mulf %9, %8 : vector<8x128xf32>
    %cst = arith.constant 1.000000e+00 : f32
    %11 = vector.broadcast %cst : f32 to vector<1x128xf32>
    %12 = arith.subf %11, %4 : vector<1x128xf32>
    %13 = vector.broadcast %12 : vector<1x128xf32> to vector<8x128xf32>
    %14 = arith.mulf %13, %7 : vector<8x128xf32>
    %15 = arith.addf %10, %14 : vector<8x128xf32>
    %cst_11 = arith.constant 1.800000e+00 : f32
    %16 = vector.broadcast %cst_11 : f32 to vector<8x128xf32>
    %17 = arith.mulf %16, %15 : vector<8x128xf32>
    %cst_12 = arith.constant 0.00999999977 : f32
    %18 = vector.broadcast %cst_12 : f32 to vector<8x128xf32>
    %19 = arith.addf %18, %17 : vector<8x128xf32>
    %c0_13 = arith.constant 0 : index
    %c0_14 = arith.constant 0 : index
    %20 = vector.load %arg10[%c0_13, %c0_14] : memref<8x128xf32, #tpu.memory_space<vmem>>, vector<8x128xf32>
    %21 = vector.broadcast %3 : vector<1x128xf32> to vector<8x128xf32>
    %22 = arith.mulf %20, %21 : vector<8x128xf32>
    %cst_15 = arith.constant 1.000000e+00 : f32
    %23 = vector.broadcast %cst_15 : f32 to vector<1x128xf32>
    %24 = arith.subf %23, %3 : vector<1x128xf32>
    %cst_16 = arith.constant 1.000000e+00 : f32
    %25 = vector.broadcast %cst_16 : f32 to vector<1x128xf32>
    %26 = arith.mulf %24, %25 : vector<1x128xf32>
    %27 = vector.broadcast %26 : vector<1x128xf32> to vector<8x128xf32>
    %28 = arith.mulf %27, %6 : vector<8x128xf32>
    %29 = arith.addf %22, %28 : vector<8x128xf32>
    %30 = arith.mulf %19, %7 : vector<8x128xf32>
    %cst_17 = arith.constant 1.000000e+00 : f32
    %31 = vector.broadcast %cst_17 : f32 to vector<8x128xf32>
    %32 = arith.mulf %30, %31 : vector<8x128xf32>
    %33 = arith.subf %29, %32 : vector<8x128xf32>
    %34 = arith.subf %33, %19 : vector<8x128xf32>
    %cst_18 = arith.constant 0.000000e+00 : f32
    %35 = vector.broadcast %cst_18 : f32 to vector<8x128xf32>
    %36 = arith.cmpf ogt, %34, %35 : vector<8x128xf32>
    %37 = arith.extui %36 : vector<8x128xi1> to vector<8x128xi32>
    %38 = arith.sitofp %37 : vector<8x128xi32> to vector<8x128xf32>
    %c0_19 = arith.constant 0 : index
    %c0_20 = arith.constant 0 : index
    %39 = vector.load %arg10[%c0_19, %c0_20] : memref<8x128xf32, #tpu.memory_space<vmem>>, vector<8x128xf32>
    tpu.vector_store %arg10[%c0_19, %c0_20], %33 {strides = array<i32>} : memref<8x128xf32, #tpu.memory_space<vmem>>, vector<8x128xf32>,
    %c0_21 = arith.constant 0 : index
    %c0_22 = arith.constant 0 : index
    %40 = vector.load %arg11[%c0_21, %c0_22] : memref<8x128xf32, #tpu.memory_space<vmem>>, vector<8x128xf32>
    tpu.vector_store %arg11[%c0_21, %c0_22], %38 {strides = array<i32>} : memref<8x128xf32, #tpu.memory_space<vmem>>, vector<8x128xf32>,
    %c0_23 = arith.constant 0 : index
    %c0_24 = arith.constant 0 : index
    %41 = vector.load %arg12[%c0_23, %c0_24] : memref<8x128xf32, #tpu.memory_space<vmem>>, vector<8x128xf32>
    tpu.vector_store %arg12[%c0_23, %c0_24], %15 {strides = array<i32>} : memref<8x128xf32, #tpu.memory_space<vmem>>, vector<8x128xf32>,
    %c0_25 = arith.constant 0 : index
    %c0_26 = arith.constant 0 : index
    %c0_27 = arith.constant 0 : index
    %42 = vector.load %arg7[%c0_25, %c0_26, %c0_27] : memref<1x8x128xf32, #tpu.memory_space<vmem>>, vector<1x8x128xf32>
    %43 = vector.shape_cast %42 : vector<1x8x128xf32> to vector<8x128xf32>
    %44 = vector.shape_cast %38 : vector<8x128xf32> to vector<1x8x128xf32>
    tpu.vector_store %arg7[%c0_25, %c0_26, %c0_27], %44 {strides = array<i32>} : memref<1x8x128xf32, #tpu.memory_space<vmem>>, vector<1x8x128xf32>,
    %c7_i32 = arith.constant 7 : i32
    %45 = arith.cmpi eq, %arg0, %c7_i32 : i32
    %46 = arith.extui %45 : i1 to i32
    %c0_i32_28 = arith.constant 0 : i32
    %47 = arith.cmpi ne, %46, %c0_i32_28 : i32
    scf.if %47 {
      %c0_29 = arith.constant 0 : index
      %c0_30 = arith.constant 0 : index
      %48 = vector.load %arg8[%c0_29, %c0_30] : memref<8x128xf32, #tpu.memory_space<vmem>>, vector<8x128xf32>
      tpu.vector_store %arg8[%c0_29, %c0_30], %33 {strides = array<i32>} : memref<8x128xf32, #tpu.memory_space<vmem>>, vector<8x128xf32>,
      %c0_31 = arith.constant 0 : index
      %c0_32 = arith.constant 0 : index
      %49 = vector.load %arg9[%c0_31, %c0_32] : memref<8x128xf32, #tpu.memory_space<vmem>>, vector<8x128xf32>
      tpu.vector_store %arg9[%c0_31, %c0_32], %15 {strides = array<i32>} : memref<8x128xf32, #tpu.memory_space<vmem>>, vector<8x128xf32>,
    } else {
    }
    return
  }
  func.func @transform_0(%arg0: i32) -> (i32, i32, i32) {
    %c0_i32 = arith.constant 0 : i32
    %c0_i32_0 = arith.constant 0 : i32
    %c0_i32_1 = arith.constant 0 : i32
    return %arg0, %c0_i32, %c0_i32_0 : i32, i32, i32
  }
  func.func @transform_1(%arg0: i32) -> (i32, i32) {
    %c0_i32 = arith.constant 0 : i32
    %c0_i32_0 = arith.constant 0 : i32
    %c0_i32_1 = arith.constant 0 : i32
    return %c0_i32, %c0_i32_0 : i32, i32
  }
  func.func @transform_2(%arg0: i32) -> (i32, i32) {
    %c0_i32 = arith.constant 0 : i32
    %c0_i32_0 = arith.constant 0 : i32
    %c0_i32_1 = arith.constant 0 : i32
    return %c0_i32, %c0_i32_0 : i32, i32
  }
  func.func @transform_3(%arg0: i32) -> (i32, i32) {
    %c0_i32 = arith.constant 0 : i32
    %c0_i32_0 = arith.constant 0 : i32
    %c0_i32_1 = arith.constant 0 : i32
    return %c0_i32, %c0_i32_0 : i32, i32
  }
  func.func @transform_4(%arg0: i32) -> (i32, i32) {
    %c0_i32 = arith.constant 0 : i32
    %c0_i32_0 = arith.constant 0 : i32
    %c0_i32_1 = arith.constant 0 : i32
    return %c0_i32, %c0_i32_0 : i32, i32
  }
  func.func @transform_5(%arg0: i32) -> (i32, i32) {
    %c0_i32 = arith.constant 0 : i32
    %c0_i32_0 = arith.constant 0 : i32
    %c0_i32_1 = arith.constant 0 : i32
    return %c0_i32, %c0_i32_0 : i32, i32
  }
  func.func @transform_6(%arg0: i32) -> (i32, i32, i32) {
    %c0_i32 = arith.constant 0 : i32
    %c0_i32_0 = arith.constant 0 : i32
    %c0_i32_1 = arith.constant 0 : i32
    return %arg0, %c0_i32, %c0_i32_0 : i32, i32, i32
  }
  func.func @transform_7(%arg0: i32) -> (i32, i32) {
    %c0_i32 = arith.constant 0 : i32
    %c0_i32_0 = arith.constant 0 : i32
    %c0_i32_1 = arith.constant 0 : i32
    return %c0_i32, %c0_i32_0 : i32, i32
  }
  func.func @transform_8(%arg0: i32) -> (i32, i32) {
    %c0_i32 = arith.constant 0 : i32
    %c0_i32_0 = arith.constant 0 : i32
    %c0_i32_1 = arith.constant 0 : i32
    return %c0_i32, %c0_i32_0 : i32, i32
  }
}

</mosaic_0001>

<llo_original>
// kernel: spike_dense_sequence.2
$region0: #{spike_dense_sequence.2}
  #allocation0 [shape = 'u32[]', space=smem, size = 0x4, offset = 0x4, fixed_abs, tag = 'smem constant byte address 0x4 - core index']
  #allocation1 [shape = 'u32[144,128]{1,0:T(1,128)}', space=vmem, size = 0x12000, scoped, tag = 'internal scratch']
  %s0 = inlined_call_operand.vmem [shape: bf16[64,128], index: 0, kind: input, shape index: {}]
  %s1 = inlined_call_operand.vmem [shape: bf16[128,128], index: 1, kind: input, shape index: {}]
  %s2 = inlined_call_operand.vmem [shape: f32[1,128], index: 2, kind: input, shape index: {}]
  %s3 = inlined_call_operand.vmem [shape: f32[64,128], index: 3, kind: output, shape index: {}]
  %s4 = sld [smem:[#allocation0]]
  $region22: #{spike_dense_sequence.2} parent=0
    _
  %s6 = ssub.s32 1, %s4
  %s7 = scalar_select 0, %s6, %s4
  // Predicated region
  $region2: #{spike_dense_sequence.2} parent=0 // pred_check
    _
  $region3: #{spike_dense_sequence.2} parent=0 // pred_check_branch
    %9 = sbr.rel (0) target = $region5
  $region4: #{spike_dense_sequence.2} parent=0 // pred_region
    _
  $region5: #{spike_dense_sequence.2} parent=0 // pred_fallthru
    _
  // Predicated region
  $region6: #{spike_dense_sequence.2} parent=0 // pred_check
    _
  $region7: #{spike_dense_sequence.2} parent=0 // pred_check_branch
    %11 = sbr.rel (0) target = $region9
  $region8: #{spike_dense_sequence.2} parent=0 // pred_region
    _
  $region9: #{spike_dense_sequence.2} parent=0 // pred_fallthru
    _
  // Predicated region
  $region10: #{spike_dense_sequence.2} parent=0 // pred_check
    _
  $region11: #{spike_dense_sequence.2} parent=0 // pred_check_branch
    %13 = sbr.rel (0) target = $region13
  $region12: #{spike_dense_sequence.2} parent=0 // pred_region
    _
  $region13: #{spike_dense_sequence.2} parent=0 // pred_fallthru
    _
  %v15 = vld [vmem:[%s0] sm:$0xf]
  %v16 = vld [vmem:[%s0 + $0x4] sm:$0xf]
  %v17 = vld [vmem:[%s0 + $0x8] sm:$0xf]
  %v18 = vld [vmem:[%s0 + $0xc] sm:$0xf]
  %v19 = vld [vmem:[%s0 + $0x10] sm:$0xf]
  %v20 = vld [vmem:[%s0 + $0x14] sm:$0xf]
  %v21 = vld [vmem:[%s0 + $0x18] sm:$0xf]
  %v22 = vld [vmem:[%s0 + $0x1c] sm:$0xf]
  %v23 = vld [vmem:[%s1] sm:$0xf]
  %v24 = vld [vmem:[%s1 + $0x4] sm:$0xf]
  %v25 = vld [vmem:[%s1 + $0x8] sm:$0xf]
  %v26 = vld [vmem:[%s1 + $0xc] sm:$0xf]
  %v27 = vld [vmem:[%s1 + $0x10] sm:$0xf]
  %v28 = vld [vmem:[%s1 + $0x14] sm:$0xf]
  %v29 = vld [vmem:[%s1 + $0x18] sm:$0xf]
  %v30 = vld [vmem:[%s1 + $0x1c] sm:$0xf]
  %v31 = vld [vmem:[%s1 + $0x20] sm:$0xf]
  %v32 = vld [vmem:[%s1 + $0x24] sm:$0xf]
  %v33 = vld [vmem:[%s1 + $0x28] sm:$0xf]
  %v34 = vld [vmem:[%s1 + $0x2c] sm:$0xf]
  %v35 = vld [vmem:[%s1 + $0x30] sm:$0xf]
  %v36 = vld [vmem:[%s1 + $0x34] sm:$0xf]
  %v37 = vld [vmem:[%s1 + $0x38] sm:$0xf]
  %v38 = vld [vmem:[%s1 + $0x3c] sm:$0xf]
  %v39 = vld [vmem:[%s2] sm:$0x1]
  %v41 = vlaneseq
  %v42 = vshrl.u32 %v41, 7
  %v43 = vsub.s32 0, %v42
  %v44 = vrot.slane %v39, %v43
  %v54 = vunpack.c.l.b16 %v15
  %v55 = vunpack.c.l.b16 %v16
  %v56 = vunpack.c.l.b16 %v17
  %v57 = vunpack.c.l.b16 %v18
  %v58 = vunpack.c.l.b16 %v19
  %v59 = vunpack.c.l.b16 %v20
  %v60 = vunpack.c.l.b16 %v21
  %v61 = vunpack.c.l.b16 %v22
  %v62 = vpack.c.b16 %v55, %v54
  %v63 = vpack.c.b16 %v57, %v56
  %v64 = vpack.c.b16 %v59, %v58
  %v65 = vpack.c.b16 %v61, %v60
  %v86 = vunpack.c.l.b16 %v23
  %v87 = vunpack.c.l.b16 %v24
  %v88 = vunpack.c.l.b16 %v25
  %v89 = vunpack.c.l.b16 %v26
  %v90 = vunpack.c.l.b16 %v27
  %v91 = vunpack.c.l.b16 %v28
  %v92 = vunpack.c.l.b16 %v29
  %v93 = vunpack.c.l.b16 %v30
  %v94 = vunpack.c.l.b16 %v31
  %v95 = vunpack.c.l.b16 %v32
  %v96 = vunpack.c.l.b16 %v33
  %v97 = vunpack.c.l.b16 %v34
  %v98 = vunpack.c.l.b16 %v35
  %v99 = vunpack.c.l.b16 %v36
  %v100 = vunpack.c.l.b16 %v37
  %v101 = vunpack.c.l.b16 %v38
  %v102 = vpack.c.b16 %v87, %v86
  %v103 = vpack.c.b16 %v89, %v88
  %v104 = vpack.c.b16 %v91, %v90
  %v105 = vpack.c.b16 %v93, %v92
  %v106 = vpack.c.b16 %v95, %v94
  %v107 = vpack.c.b16 %v97, %v96
  %v108 = vpack.c.b16 %v99, %v98
  %v109 = vpack.c.b16 %v101, %v100
  %118 = vmatprep.subr.bf16.mxu0 0
  %119 = vmatpush1.bf16.msra.mxu0 %v102
  %120 = vmatprep.subr.bf16.mxu0 0
  %121 = vmatpush1.bf16.msra.mxu0 %v103
  %122 = vmatprep.subr.bf16.mxu0 0
  %123 = vmatpush1.bf16.msra.mxu0 %v104
  %124 = vmatprep.subr.bf16.mxu0 0
  %125 = vmatpush1.bf16.msra.mxu0 %v105
  %126 = vmatprep.subr.bf16.mxu0 0
  %127 = vmatpush1.bf16.msra.mxu0 %v106
  %128 = vmatprep.subr.bf16.mxu0 0
  %129 = vmatpush1.bf16.msra.mxu0 %v107
  %130 = vmatprep.subr.bf16.mxu0 0
  %131 = vmatpush1.bf16.msra.mxu0 %v108
  %132 = vmatprep.subr.bf16.mxu0 0
  %133 = vmatpush1.bf16.msra.mxu0 %v109
  %134 = vmatprep.subr.bf16.mxu0 0
  %135 = vmatpush1.bf16.msra.mxu0 0
  %136 = vmatprep.subr.bf16.mxu0 0
  %137 = vmatpush1.bf16.msra.mxu0 0
  %138 = vmatprep.subr.bf16.mxu0 0
  %139 = vmatpush1.bf16.msra.mxu0 0
  %140 = vmatprep.subr.bf16.mxu0 0
  %141 = vmatpush1.bf16.msra.mxu0 0
  %142 = vmatprep.subr.bf16.mxu0 0
  %143 = vmatpush1.bf16.msra.mxu0 0
  %144 = vmatprep.subr.bf16.mxu0 0
  %145 = vmatpush1.bf16.msra.mxu0 0
  %146 = vmatprep.subr.bf16.mxu0 0
  %147 = vmatpush1.bf16.msra.mxu0 0
  %148 = vmatprep.subr.bf16.mxu0 0
  %149 = vmatpush1.bf16.msra.mxu0 0
  %150 = vmatprep.mubr.bf16.mxu0 0
  %151 = vmatmul.mubr.bf16.gmra.mrb[0].mxu0 %v62
  %v152 = vpop.f32.mrb[0].mxu0
  %v153 = vadd.f32 %v44, %v152
  %v154 = vpop.f32.mrb[0].mxu0
  %v155 = vpop.f32.mrb[0].mxu0
  %v156 = vadd.f32 %v44, %v155
  %v157 = vpop.f32.mrb[0].mxu0
  %158 = vmatprep.mubr.bf16.mxu0 0
  %159 = vmatmul.mubr.bf16.gmra.mrb[0].mxu0 %v63
  %v160 = vpop.f32.mrb[0].mxu0
  %v161 = vadd.f32 %v44, %v160
  %v162 = vpop.f32.mrb[0].mxu0
  %v163 = vpop.f32.mrb[0].mxu0
  %v164 = vadd.f32 %v44, %v163
  %v165 = vpop.f32.mrb[0].mxu0
  %166 = vmatprep.mubr.bf16.mxu0 0
  %167 = vmatmul.mubr.bf16.gmra.mrb[0].mxu0 %v64
  %v168 = vpop.f32.mrb[0].mxu0
  %v169 = vadd.f32 %v44, %v168
  %v170 = vpop.f32.mrb[0].mxu0
  %v171 = vpop.f32.mrb[0].mxu0
  %v172 = vadd.f32 %v44, %v171
  %v173 = vpop.f32.mrb[0].mxu0
  %174 = vmatprep.mubr.bf16.mxu0 0
  %175 = vmatmul.mubr.bf16.gmra.mrb[0].mxu0 %v65
  %v176 = vpop.f32.mrb[0].mxu0
  %v177 = vadd.f32 %v44, %v176
  %v178 = vpop.f32.mrb[0].mxu0
  %v179 = vpop.f32.mrb[0].mxu0
  %v180 = vadd.f32 %v44, %v179
  %v181 = vpop.f32.mrb[0].mxu0
  %182 = vdwg.mxu0
  %183 = vst [vmem:[%s3] sm:$0xff] %v153
  %184 = vst [vmem:[%s3 + $0x8] sm:$0xff] %v156
  %185 = vst [vmem:[%s3 + $0x10] sm:$0xff] %v161
  %186 = vst [vmem:[%s3 + $0x18] sm:$0xff] %v164
  %187 = vst [vmem:[%s3 + $0x20] sm:$0xff] %v169
  %188 = vst [vmem:[%s3 + $0x28] sm:$0xff] %v172
  %189 = vst [vmem:[%s3 + $0x30] sm:$0xff] %v177
  %190 = vst [vmem:[%s3 + $0x38] sm:$0xff] %v180
  // Predicated region
  $region14: #{spike_dense_sequence.2} parent=0 // pred_check
    _
  $region15: #{spike_dense_sequence.2} parent=0 // pred_check_branch
    %192 = sbr.rel (0) target = $region17
  $region16: #{spike_dense_sequence.2} parent=0 // pred_region
    _
  $region17: #{spike_dense_sequence.2} parent=0 // pred_fallthru
    _
  // Predicated region
  $region18: #{spike_dense_sequence.2} parent=0 // pred_check
    _
  $region19: #{spike_dense_sequence.2} parent=0 // pred_check_branch
    %194 = sbr.rel (0) target = $region21
  $region20: #{spike_dense_sequence.2} parent=0 // pred_region
    _
  $region21: #{spike_dense_sequence.2} parent=0 // pred_fallthru
    _

// kernel: spike_dense_sequence.3
$region0: #{spike_dense_sequence.3}
  #allocation0 [shape = 'u32[]', space=smem, size = 0x4, offset = 0x4, fixed_abs, tag = 'smem constant byte address 0x4 - core index']
  #allocation1 [shape = 'u32[144,128]{1,0:T(1,128)}', space=vmem, size = 0x12000, scoped, tag = 'internal scratch']
  #allocation2 [shape = 'f32[8,128]{1,0:T(8,128)}', space=vmem, size = 0x1000, scoped, tag = 'scratch operand']
  #allocation3 [shape = 'f32[8,128]{1,0:T(8,128)}', space=vmem, size = 0x1000, scoped, tag = 'scratch operand']
  #allocation4 [shape = 'f32[8,128]{1,0:T(8,128)}', space=vmem, size = 0x1000, scoped, tag = 'scratch operand']
  %s0 = inlined_call_operand.vmem [shape: f32[8,8,128], index: 0, kind: input, shape index: {}]
  %s1 = inlined_call_operand.vmem [shape: f32[1,128], index: 1, kind: input, shape index: {}]
  %s2 = inlined_call_operand.vmem [shape: f32[1,128], index: 2, kind: input, shape index: {}]
  %s3 = inlined_call_operand.vmem [shape: f32[8,128], index: 3, kind: input, shape index: {}]
  %s4 = inlined_call_operand.vmem [shape: f32[8,128], index: 4, kind: input, shape index: {}]
  %s5 = inlined_call_operand.vmem [shape: f32[8,128], index: 5, kind: input, shape index: {}]
  %s6 = inlined_call_operand.hbm [shape: f32[8,8,128], index: 6, kind: output, shape index: {0}]
  %s7 = inlined_call_operand.hbm [shape: f32[8,128], index: 7, kind: output, shape index: {1}]
  %s8 = inlined_call_operand.hbm [shape: f32[8,128], index: 8, kind: output, shape index: {2}]
  %9 = xla_tuple %s6, %s7, %s8
  %s10 = sld [smem:[#allocation0]]
  $region81: #{spike_dense_sequence.3} parent=0
    _
  %s12 = ssub.s32 1, %s10
  %s13 = scalar_select 0, %s12, %s10
  $region1: #{spike_dense_sequence.3} parent=0
    #allocation5 [shape = 'u8[8192]{0}', space=vmem, size = 0x2000, scoped, tag = 'output window, operand 0']
    #allocation6 [shape = 's32[2]{0}', space=sflag, size = 0x8, scoped, tag = 'scoped memory for spike_dense_sequence.3']
    #allocation7 [shape = 'u8[4096]{0}', space=vmem, size = 0x1000, scoped, tag = 'output window, operand 1, single buffered']
    #allocation8 [shape = 's32[1]{0}', space=sflag, size = 0x4, scoped, tag = 'scoped memory for spike_dense_sequence.3']
    #allocation9 [shape = 'u8[4096]{0}', space=vmem, size = 0x1000, scoped, tag = 'output window, operand 2, single buffered']
    %14 = vsyncpa [#allocation6], 0
    %s15 = scalar_lea.sflag [#allocation6], 1
    %16 = vsyncpa %s15, 0
    %17 = vsyncpa [#allocation8], 0
    loop: start=0, step=1, limit=10
    $region2: #{spike_dense_sequence.3} parent=1 // loop_pre_header
      _
    $region3: #{spike_dense_sequence.3} parent=1 // loop_header
      %s19 = sphi 0, %s23
      %p20 = scmp.ge.s32.totalorder %s19, 10
      %s29 = sphi 0, %s31
      %s32 = sphi 0, %s29
      %s33 = sphi 0, %s32
      %s49 = sphi 0, %s33
      %s53 = sphi 0, %s53
      %s55 = sphi 0, %s53
      %s56 = sphi 0, %s55
      %s70 = sphi 0, %s56
      %s74 = sphi 0, %s74
      %s76 = sphi 0, %s74
      %s77 = sphi 0, %s76
      %s91 = sphi 0, %s77
      %s95 = sphi 0, %s95
      %s97 = sphi 0, %s95
      %s98 = sphi 0, %s97
      %s112 = sphi 0, %s98
      %s116 = sphi 0, %s116
      %s118 = sphi 0, %s116
      %s119 = sphi 0, %s118
      %s133 = sphi 0, %s119
      %s137 = sphi 0, %s137
      %s139 = sphi 0, %s137
      %s140 = sphi 0, %s139
      %s154 = sphi 0, %s140
      %s160 = sphi 0, %s162
      %s163 = sphi 0, %s160
      %s164 = sphi 0, %s163
      %s180 = sphi 0, %s164
      %s184 = sphi 0, %s184
      %s186 = sphi 0, %s184
      %s187 = sphi 0, %s186
      %s201 = sphi 0, %s187
      %s205 = sphi 0, %s205
      %s207 = sphi 0, %s205
      %s208 = sphi 0, %s207
      %s222 = sphi 0, %s208
    $region4: #{spike_dense_sequence.3} parent=1 // loop_header_branch
      %22 = sbr.rel (%p20) target = $region8
    $region5: #{spike_dense_sequence.3} parent=1 // loop_body
      %s24 = ssub.s32 %s19, 1
      %s25 = ssub.s32 %s19, 2
      %s26 = sadd.s32 %s19, 1
      %s27 = ssub.s32 %s19, %s26
      %p28 = scmp.eq.s32.totalorder %s27, 0
      %s30 = sadd.s32 %s29, 1
      %s31 = scalar_select %p28, %s29, %s30
      %p34 = pneg %p28
      %p35 = scmp.eq.s32.totalorder %s19, 7
      %p36 = por %p34, %p35
      %p37 = scmp.ne.s32.totalorder %s29, %s32
      %p38 = scmp.eq.s32.totalorder %s19, 0
      %p39 = por %p37, %p38
      %p40 = scmp.ne.s32.totalorder %s29, %s32
      %p41 = scmp.eq.s32.totalorder %s24, 7
      %p42 = por %p40, %p41
      %p43 = scmp.ne.s32.totalorder %s32, %s33
      %p44 = scmp.eq.s32.totalorder %s24, 0
      %p45 = por %p43, %p44
      %p46 = scmp.ne.s32.totalorder %s32, %s33
      %p47 = scmp.eq.s32.totalorder %s25, 7
      %p48 = por %p46, %p47
      %p50 = scmp.ne.s32.totalorder %s33, %s49
      %p51 = scmp.eq.s32.totalorder %s25, 0
      %p52 = por %p50, %p51
      %s54 = sadd.s32 %s53, 1
      %p57 = scmp.eq.s32.totalorder %s19, 7
      %p58 = scmp.ne.s32.totalorder %s53, %s55
      %p59 = scmp.eq.s32.totalorder %s19, 0
      %p60 = por %p58, %p59
      %p61 = scmp.ne.s32.totalorder %s53, %s55
      %p62 = scmp.eq.s32.totalorder %s24, 7
      %p63 = por %p61, %p62
      %p64 = scmp.ne.s32.totalorder %s55, %s56
      %p65 = scmp.eq.s32.totalorder %s24, 0
      %p66 = por %p64, %p65
      %p67 = scmp.ne.s32.totalorder %s55, %s56
      %p68 = scmp.eq.s32.totalorder %s25, 7
      %p69 = por %p67, %p68
      %p71 = scmp.ne.s32.totalorder %s56, %s70
      %p72 = scmp.eq.s32.totalorder %s25, 0
      %p73 = por %p71, %p72
      %s75 = sadd.s32 %s74, 1
      %p78 = scmp.eq.s32.totalorder %s19, 7
      %p79 = scmp.ne.s32.totalorder %s74, %s76
      %p80 = scmp.eq.s32.totalorder %s19, 0
      %p81 = por %p79, %p80
      %p82 = scmp.ne.s32.totalorder %s74, %s76
      %p83 = scmp.eq.s32.totalorder %s24, 7
      %p84 = por %p82, %p83
      %p85 = scmp.ne.s32.totalorder %s76, %s77
      %p86 = scmp.eq.s32.totalorder %s24, 0
      %p87 = por %p85, %p86
      %p88 = scmp.ne.s32.totalorder %s76, %s77
      %p89 = scmp.eq.s32.totalorder %s25, 7
      %p90 = por %p88, %p89
      %p92 = scmp.ne.s32.totalorder %s77, %s91
      %p93 = scmp.eq.s32.totalorder %s25, 0
      %p94 = por %p92, %p93
      %s96 = sadd.s32 %s95, 1
      %p99 = scmp.eq.s32.totalorder %s19, 7
      %p100 = scmp.ne.s32.totalorder %s95, %s97
      %p101 = scmp.eq.s32.totalorder %s19, 0
      %p102 = por %p100, %p101
      %p103 = scmp.ne.s32.totalorder %s95, %s97
      %p104 = scmp.eq.s32.totalorder %s24, 7
      %p105 = por %p103, %p104
      %p106 = scmp.ne.s32.totalorder %s97, %s98
      %p107 = scmp.eq.s32.totalorder %s24, 0
      %p108 = por %p106, %p107
      %p109 = scmp.ne.s32.totalorder %s97, %s98
      %p110 = scmp.eq.s32.totalorder %s25, 7
      %p111 = por %p109, %p110
      %p113 = scmp.ne.s32.totalorder %s98, %s112
      %p114 = scmp.eq.s32.totalorder %s25, 0
      %p115 = por %p113, %p114
      %s117 = sadd.s32 %s116, 1
      %p120 = scmp.eq.s32.totalorder %s19, 7
      %p121 = scmp.ne.s32.totalorder %s116, %s118
      %p122 = scmp.eq.s32.totalorder %s19, 0
      %p123 = por %p121, %p122
      %p124 = scmp.ne.s32.totalorder %s116, %s118
      %p125 = scmp.eq.s32.totalorder %s24, 7
      %p126 = por %p124, %p125
      %p127 = scmp.ne.s32.totalorder %s118, %s119
      %p128 = scmp.eq.s32.totalorder %s24, 0
      %p129 = por %p127, %p128
      %p130 = scmp.ne.s32.totalorder %s118, %s119
      %p131 = scmp.eq.s32.totalorder %s25, 7
      %p132 = por %p130, %p131
      %p134 = scmp.ne.s32.totalorder %s119, %s133
      %p135 = scmp.eq.s32.totalorder %s25, 0
      %p136 = por %p134, %p135
      %s138 = sadd.s32 %s137, 1
      %p141 = scmp.eq.s32.totalorder %s19, 7
      %p142 = scmp.ne.s32.totalorder %s137, %s139
      %p143 = scmp.eq.s32.totalorder %s19, 0
      %p144 = por %p142, %p143
      %p145 = scmp.ne.s32.totalorder %s137, %s139
      %p146 = scmp.eq.s32.totalorder %s24, 7
      %p147 = por %p145, %p146
      %p148 = scmp.ne.s32.totalorder %s139, %s140
      %p149 = scmp.eq.s32.totalorder %s24, 0
      %p150 = por %p148, %p149
      %p151 = scmp.ne.s32.totalorder %s139, %s140
      %p152 = scmp.eq.s32.totalorder %s25, 7
      %p153 = por %p151, %p152
      %p155 = scmp.ne.s32.totalorder %s140, %s154
      %p156 = scmp.eq.s32.totalorder %s25, 0
      %p157 = por %p155, %p156
      %s158 = ssub.s32 %s19, %s26
      %p159 = scmp.eq.s32.totalorder %s158, 0
      %s161 = sadd.s32 %s160, 1
      %s162 = scalar_select %p159, %s160, %s161
      %p165 = pneg %p159
      %p166 = scmp.eq.s32.totalorder %s19, 7
      %p167 = por %p165, %p166
      %p168 = scmp.ne.s32.totalorder %s160, %s163
      %p169 = scmp.eq.s32.totalorder %s19, 0
      %p170 = por %p168, %p169
      %p171 = scmp.ne.s32.totalorder %s160, %s163
      %p172 = scmp.eq.s32.totalorder %s24, 7
      %p173 = por %p171, %p172
      %p174 = scmp.ne.s32.totalorder %s163, %s164
      %p175 = scmp.eq.s32.totalorder %s24, 0
      %p176 = por %p174, %p175
      %p177 = scmp.ne.s32.totalorder %s163, %s164
      %p178 = scmp.eq.s32.totalorder %s25, 7
      %p179 = por %p177, %p178
      %p181 = scmp.ne.s32.totalorder %s164, %s180
      %p182 = scmp.eq.s32.totalorder %s25, 0
      %p183 = por %p181, %p182
      %s185 = sadd.s32 %s184, 1
      %p188 = scmp.eq.s32.totalorder %s19, 7
      %p189 = scmp.ne.s32.totalorder %s184, %s186
      %p190 = scmp.eq.s32.totalorder %s19, 0
      %p191 = por %p189, %p190
      %p192 = scmp.ne.s32.totalorder %s184, %s186
      %p193 = scmp.eq.s32.totalorder %s24, 7
      %p194 = por %p192, %p193
      %p195 = scmp.ne.s32.totalorder %s186, %s187
      %p196 = scmp.eq.s32.totalorder %s24, 0
      %p197 = por %p195, %p196
      %p198 = scmp.ne.s32.totalorder %s186, %s187
      %p199 = scmp.eq.s32.totalorder %s25, 7
      %p200 = por %p198, %p199
      %p202 = scmp.ne.s32.totalorder %s187, %s201
      %p203 = scmp.eq.s32.totalorder %s25, 0
      %p204 = por %p202, %p203
      %s206 = sadd.s32 %s205, 1
      %p209 = scmp.eq.s32.totalorder %s19, 7
      %p210 = scmp.ne.s32.totalorder %s205, %s207
      %p211 = scmp.eq.s32.totalorder %s19, 0
      %p212 = por %p210, %p211
      %p213 = scmp.ne.s32.totalorder %s205, %s207
      %p214 = scmp.eq.s32.totalorder %s24, 7
      %p215 = por %p213, %p214
      %p216 = scmp.ne.s32.totalorder %s207, %s208
      %p217 = scmp.eq.s32.totalorder %s24, 0
      %p218 = por %p216, %p217
      %p219 = scmp.ne.s32.totalorder %s207, %s208
      %p220 = scmp.eq.s32.totalorder %s25, 7
      %p221 = por %p219, %p220
      %p223 = scmp.ne.s32.totalorder %s208, %s222
      %p224 = scmp.eq.s32.totalorder %s25, 0
      %p225 = por %p223, %p224
      %p226 = scmp.le.s32.totalorder 1, %s19
      %p227 = scmp.lt.s32.totalorder %s19, 9
      %p228 = pnand %p226, %p227
      %p229 = pneg %p228
      // Predicated region
      $region9: #{spike_dense_sequence.3} parent=5 // pred_check
        _
      $region10: #{spike_dense_sequence.3} parent=5 // pred_check_branch
        %231 = sbr.rel (%p228) target = $region12
      $region11: #{spike_dense_sequence.3} parent=5 // pred_region
        %s232 = ssub.s32 %s19, 1
        // Predicated region
        $region13: #{spike_dense_sequence.3} parent=11 // pred_check
          %p233 = pneg %p66
        $region14: #{spike_dense_sequence.3} parent=11 // pred_check_branch
          %235 = sbr.rel (%p233) target = $region16
        $region15: #{spike_dense_sequence.3} parent=11 // pred_region
          _
        $region16: #{spike_dense_sequence.3} parent=11 // pred_fallthru
          _
        // Predicated region
        $region17: #{spike_dense_sequence.3} parent=11 // pred_check
          %p236 = pneg %p87
        $region18: #{spike_dense_sequence.3} parent=11 // pred_check_branch
          %238 = sbr.rel (%p236) target = $region20
        $region19: #{spike_dense_sequence.3} parent=11 // pred_region
          _
        $region20: #{spike_dense_sequence.3} parent=11 // pred_fallthru
          _
        // Predicated region
        $region21: #{spike_dense_sequence.3} parent=11 // pred_check
          %p239 = pneg %p108
        $region22: #{spike_dense_sequence.3} parent=11 // pred_check_branch
          %241 = sbr.rel (%p239) target = $region24
        $region23: #{spike_dense_sequence.3} parent=11 // pred_region
          _
        $region24: #{spike_dense_sequence.3} parent=11 // pred_fallthru
          _
        // Predicated region
        $region25: #{spike_dense_sequence.3} parent=11 // pred_check
          %p242 = pneg %p129
        $region26: #{spike_dense_sequence.3} parent=11 // pred_check_branch
          %244 = sbr.rel (%p242) target = $region28
        $region27: #{spike_dense_sequence.3} parent=11 // pred_region
          _
        $region28: #{spike_dense_sequence.3} parent=11 // pred_fallthru
          _
        // Predicated region
        $region29: #{spike_dense_sequence.3} parent=11 // pred_check
          %p245 = pneg %p150
        $region30: #{spike_dense_sequence.3} parent=11 // pred_check_branch
          %247 = sbr.rel (%p245) target = $region32
        $region31: #{spike_dense_sequence.3} parent=11 // pred_region
          _
        $region32: #{spike_dense_sequence.3} parent=11 // pred_fallthru
          _
      $region12: #{spike_dense_sequence.3} parent=5 // pred_fallthru
        _
      %p248 = scmp.lt.s32.totalorder %s19, 8
      // Predicated region
      $region33: #{spike_dense_sequence.3} parent=5 // pred_check
        %p249 = pneg %p248
      $region34: #{spike_dense_sequence.3} parent=5 // pred_check_branch
        %251 = sbr.rel (%p249) target = $region36
      $region35: #{spike_dense_sequence.3} parent=5 // pred_region
        // Predicated region
        $region37: #{spike_dense_sequence.3} parent=35 // pred_check
          %p252 = pneg %p39
        $region38: #{spike_dense_sequence.3} parent=35 // pred_check_branch
          %254 = sbr.rel (%p252) target = $region40
        $region39: #{spike_dense_sequence.3} parent=35 // pred_region
          %p255 = scmp.lt.s32.totalorder %s19, 7
          %s256 = scalar_select %p255, %s19, 7
          %s257 = smul.addr %s256, 8
          %s258 = scalar_lea.vmem %s0, %s257
        $region40: #{spike_dense_sequence.3} parent=35 // pred_fallthru
          _
      $region36: #{spike_dense_sequence.3} parent=5 // pred_fallthru
        _
      %p259 = scmp.le.s32.totalorder 1, %s19
      %p260 = scmp.lt.s32.totalorder %s19, 9
      %p261 = pnand %p259, %p260
      %p262 = pneg %p261
      // Predicated region
      $region41: #{spike_dense_sequence.3} parent=5 // pred_check
        _
      $region42: #{spike_dense_sequence.3} parent=5 // pred_check_branch
        %264 = sbr.rel (%p261) target = $region44
      $region43: #{spike_dense_sequence.3} parent=5 // pred_region
        %s265 = ssub.s32 %s19, 1
        %p266 = scmp.lt.s32.totalorder %s24, 7
        %s267 = scalar_select %p266, %s24, 7
        %s268 = smul.addr %s267, 8
        %s269 = scalar_lea.vmem %s0, %s268
        %p270 = pneg %p45
        %p271 = pneg %p42
        %p272 = pneg %p66
        %p273 = pneg %p63
        %p274 = pneg %p87
        %p275 = pneg %p84
        %p276 = pneg %p108
        %p277 = pneg %p105
        %p278 = pneg %p129
        %p279 = pneg %p126
        %p280 = pneg %p150
        %p281 = pneg %p147
        %p282 = pneg %p176
        %p283 = pneg %p173
        %s284 = sand.u32 %s163, 1
        %s285 = scalar_lea.sflag [#allocation6], %s284
        %s286 = sand.u32 %s163, 1
        %s287 = smul.addr %s286, 8
        %s288 = scalar_lea.vmem [#allocation5], %s287
        %p289 = pneg %p197
        %p290 = pneg %p194
        %p291 = pneg %p218
        %p292 = pneg %p215
        %p293 = scmp.lt.s32.totalorder %s24, 7
        %s294 = scalar_select %p293, %s24, 7
        %s295 = smul.addr %s294, 8
        %s296 = scalar_lea.vmem %s0, %s295
        %p297 = scmp.eq.s32.totalorder %s24, 0
        // Predicated region
        $region45: #{spike_dense_sequence.3} parent=43 // pred_check
          %p298 = pneg %p297
        $region46: #{spike_dense_sequence.3} parent=43 // pred_check_branch
          %300 = sbr.rel (%p298) target = $region48
        $region47: #{spike_dense_sequence.3} parent=43 // pred_region
          %v301 = vld [vmem:[%s3] sm:$0xff]
          %302 = vst [vmem:[#allocation2] sm:$0xff] %v301
          %v303 = vld [vmem:[%s4] sm:$0xff]
          %304 = vst [vmem:[#allocation3] sm:$0xff] %v303
          %v305 = vld [vmem:[%s5] sm:$0xff]
          %306 = vst [vmem:[#allocation4] sm:$0xff] %v305
        $region48: #{spike_dense_sequence.3} parent=43 // pred_fallthru
          _
        %v307 = vld [vmem:[%s1] sm:$0x1]
        %v308 = vld [vmem:[%s2] sm:$0x1]
        %v309 = vld [vmem:[%s296] sm:$0xff]
        %v310 = vld [vmem:[#allocation3] sm:$0xff]
        %v311 = vld [vmem:[#allocation4] sm:$0xff]
        %v313 = vlaneseq
        %v314 = vshrl.u32 %v313, 7
        %v315 = vsub.s32 0, %v314
        %v316 = vrot.slane %v308, %v315
        %v318 = vmul.f32 %v316, %v311
        %v319 = vsub.f32 1.0, %v308
        %v321 = vlaneseq
        %v322 = vshrl.u32 %v321, 7
        %v323 = vsub.s32 0, %v322
        %v324 = vrot.slane %v319, %v323
        %v326 = vmul.f32 %v324, %v310
        %v327 = vadd.f32 %v318, %v326
        %v328 = vmul.f32 %v327, 1.8
        %v329 = vadd.f32 %v328, 0.01
        %v330 = vld [vmem:[#allocation2] sm:$0xff]
        %v332 = vlaneseq
        %v333 = vshrl.u32 %v332, 7
        %v334 = vsub.s32 0, %v333
        %v335 = vrot.slane %v307, %v334
        %v337 = vmul.f32 %v330, %v335
        %v338 = vsub.f32 1.0, %v307
        %v340 = vlaneseq
        %v341 = vshrl.u32 %v340, 7
        %v342 = vsub.s32 0, %v341
        %v343 = vrot.slane %v338, %v342
        %v345 = vmul.f32 %v343, %v309
        %v346 = vadd.f32 %v337, %v345
        %v347 = vmul.f32 %v329, %v310
        %v348 = vsub.f32 %v346, %v347
        %v349 = vsub.f32 %v348, %v329
        %vm350 = vcmp.gt.f32.partialorder %v349, 0.0
        %v351 = vsel %vm350, 1, 0
        %v352 = vcvt.s32.f32 %v351
        %353 = vst [vmem:[#allocation2] sm:$0xff] %v348
        %354 = vst [vmem:[#allocation3] sm:$0xff] %v352
        %355 = vst [vmem:[#allocation4] sm:$0xff] %v327
        %356 = vst [vmem:[%s288] sm:$0xff] %v352
        %p357 = scmp.eq.s32.totalorder %s24, 7
        // Predicated region
        $region49: #{spike_dense_sequence.3} parent=43 // pred_check
          %p358 = pneg %p357
        $region50: #{spike_dense_sequence.3} parent=43 // pred_check_branch
          %360 = sbr.rel (%p358) target = $region52
        $region51: #{spike_dense_sequence.3} parent=43 // pred_region
          %361 = vst [vmem:[#allocation7] sm:$0xff] %v348
          %362 = vst [vmem:[#allocation9] sm:$0xff] %v327
        $region52: #{spike_dense_sequence.3} parent=43 // pred_fallthru
          _
        %s363 = sand.u32 %s163, 1
        %s364 = scalar_lea.sflag [#allocation6], %s363
        %s365 = sand.u32 %s163, 1
        %s366 = smul.addr %s365, 8
        %s367 = scalar_lea.vmem [#allocation5], %s366
        // Predicated region
        $region53: #{spike_dense_sequence.3} parent=43 // pred_check
          %p368 = pneg %p173
        $region54: #{spike_dense_sequence.3} parent=43 // pred_check_branch
          %370 = sbr.rel (%p368) target = $region56
        $region55: #{spike_dense_sequence.3} parent=43 // pred_region
          %s372 = ssub.s32 128, 128
          %373 = vsyncadd %s364, %s372
          %s374 = smul.addr %s24, 128
          %s375 = scalar_lea.hbm %s6, %s374
          %s377 = sshll.u32 %s367, 4
          %s378 = int_to_ptr.vmem [resolvable:$true] %s377
          %380 = dma.vmem_to_hbm [thread:$0]  %s378, 128, %s375, %s364
        $region56: #{spike_dense_sequence.3} parent=43 // pred_fallthru
          _
        // Predicated region
        $region57: #{spike_dense_sequence.3} parent=43 // pred_check
          %p381 = pneg %p194
        $region58: #{spike_dense_sequence.3} parent=43 // pred_check_branch
          %383 = sbr.rel (%p381) target = $region60
        $region59: #{spike_dense_sequence.3} parent=43 // pred_region
          %s385 = ssub.s32 128, 128
          %386 = vsyncadd [#allocation8], %s385
          %s388 = sshll.u32 [#allocation7], 4
          %s389 = int_to_ptr.vmem [resolvable:$true] %s388
          %391 = dma.vmem_to_hbm [thread:$0]  %s389, 128, %s7, [#allocation8]
        $region60: #{spike_dense_sequence.3} parent=43 // pred_fallthru
          _
        // Predicated region
        $region61: #{spike_dense_sequence.3} parent=43 // pred_check
          %p392 = pneg %p215
        $region62: #{spike_dense_sequence.3} parent=43 // pred_check_branch
          %394 = sbr.rel (%p392) target = $region64
        $region63: #{spike_dense_sequence.3} parent=43 // pred_region
          %s396 = ssub.s32 128, 128
          %397 = vsyncadd [#allocation8], %s396
          %s399 = sshll.u32 [#allocation9], 4
          %s400 = int_to_ptr.vmem [resolvable:$true] %s399
          %402 = dma.vmem_to_hbm [thread:$0]  %s400, 128, %s8, [#allocation8]
        $region64: #{spike_dense_sequence.3} parent=43 // pred_fallthru
          _
        // Predicated region
        $region65: #{spike_dense_sequence.3} parent=43 // pred_check
          %p403 = pneg %p194
        $region66: #{spike_dense_sequence.3} parent=43 // pred_check_branch
          %405 = sbr.rel (%p403) target = $region68
        $region67: #{spike_dense_sequence.3} parent=43 // pred_region
          %406 = dma.done [#allocation8], 128
        $region68: #{spike_dense_sequence.3} parent=43 // pred_fallthru
          _
        // Predicated region
        $region69: #{spike_dense_sequence.3} parent=43 // pred_check
          %p407 = pneg %p215
        $region70: #{spike_dense_sequence.3} parent=43 // pred_check_branch
          %409 = sbr.rel (%p407) target = $region72
        $region71: #{spike_dense_sequence.3} parent=43 // pred_region
          %410 = dma.done [#allocation8], 128
        $region72: #{spike_dense_sequence.3} parent=43 // pred_fallthru
          _
      $region44: #{spike_dense_sequence.3} parent=5 // pred_fallthru
        _
      %p411 = scmp.le.s32.totalorder 2, %s19
      // Predicated region
      $region73: #{spike_dense_sequence.3} parent=5 // pred_check
        %p412 = pneg %p411
      $region74: #{spike_dense_sequence.3} parent=5 // pred_check_branch
        %414 = sbr.rel (%p412) target = $region76
      $region75: #{spike_dense_sequence.3} parent=5 // pred_region
        %s415 = ssub.s32 %s19, 2
        // Predicated region
        $region77: #{spike_dense_sequence.3} parent=75 // pred_check
          %p416 = pneg %p179
        $region78: #{spike_dense_sequence.3} parent=75 // pred_check_branch
          %418 = sbr.rel (%p416) target = $region80
        $region79: #{spike_dense_sequence.3} parent=75 // pred_region
          %s419 = sand.u32 %s164, 1
          %s420 = scalar_lea.sflag [#allocation6], %s419
          %s421 = sand.u32 %s164, 1
          %s422 = smul.addr %s421, 8
          %s423 = scalar_lea.vmem [#allocation5], %s422
          %424 = dma.done %s420, 128
        $region80: #{spike_dense_sequence.3} parent=75 // pred_fallthru
          _
      $region76: #{spike_dense_sequence.3} parent=5 // pred_fallthru
        _
    $region6: #{spike_dense_sequence.3} parent=1 // loop_footer
      %s23 = sadd.s32 1, %s19
    $region7: #{spike_dense_sequence.3} parent=1 // loop_footer_branch
      %18 = sbr.rel target = $region3
    $region8: #{spike_dense_sequence.3} parent=1 // loop_exit
      _
    %425 = vsyncpa [#allocation6], 1
    %s426 = scalar_lea.sflag [#allocation6], 1
    %427 = vsyncpa %s426, 1
    %428 = vsyncpa [#allocation8], 1

</llo_original>
